<compile_context>
chip_gen: v5e
topology: v5e:2x2
jax: 0.10.0
libtpu: 0.0.40
codegen_flags: <defaults>
</compile_context>

<pallas_src>
import functools

import jax
import jax.numpy as jnp
from jax.experimental import pallas as pl
from jax.experimental.pallas import tpu as pltpu


def _attention_layer_kernel(x_ref, w_ref, o_ref, *, n_rows, size_out, out_p):
    x = x_ref[...]                      # [N, size_in]
    w = w_ref[...]                      # [size_in, 3*out_p]  fused+padded Wq|Wk|Wv

    # Single fused projection matmul + sigmoid (MXU, f32 accumulate).
    proj = jax.nn.sigmoid(
        jnp.dot(x, w, preferred_element_type=jnp.float32))   # [N, 3*out_p]

    # Lane-aligned (multiple-of-128) slices -> cheap vreg selection, no shuffles.
    q_blk = proj[:, 0 * out_p:1 * out_p]
    k_blk = proj[:, 1 * out_p:2 * out_p]
    v_blk = proj[:, 2 * out_p:3 * out_p]

    # Fold the 1/N softmax scale into q AND zero the padded q lanes in one VPU
    # multiply. Padded k lanes (sigmoid(0)=0.5) then contribute exactly 0 to
    # the contraction, so scores are exact despite the lane padding.
    # n_rows is a Python constant from the wrapper (NOT x_ref.shape[0]).
    lane = jax.lax.broadcasted_iota(jnp.int32, (1, out_p), 1)
    q = q_blk * jnp.where(lane < size_out,
                          jnp.float32(1.0 / n_rows), jnp.float32(0.0))

    # scores = (q / N) @ k.T  -- contract the feature axis, no explicit k.T.
    scores = jax.lax.dot_general(
        q, k_blk,
        dimension_numbers=(((1,), (1,)), ((), ())),
        preferred_element_type=jnp.float32)                   # [N, N]

    # Numerically-stable softmax over the last axis (== torch dim=1 here).
    m = jnp.max(scores, axis=-1, keepdims=True)
    e = jnp.exp(scores - m)
    denom = jnp.sum(e, axis=-1, keepdims=True)
    p = e * pl.reciprocal(denom, approx=True)                 # EUP slot

    # Lane-dense [N, out_p] store; wrapper slices off the padded columns.
    o_ref[...] = jnp.dot(p, v_blk,
                         preferred_element_type=jnp.float32).astype(o_ref.dtype)


def _round_up(a, b):
    return (a + b - 1) // b * b


@jax.jit
def attention_layer(x, wq, wk, wv):
    """x: [N, size_in]; wq/wk/wv: [size_in, size_out] (torch weight transposed)."""
    n, size_in = x.shape
    size_out = wq.shape[1]
    out_p = _round_up(size_out, 128)     # lane-dense width for q/k/v and output

    # Fuse + lane-pad the three projection weights: [size_in, 3*out_p].
    pad = ((0, 0), (0, out_p - size_out))
    w_fused = jnp.concatenate(
        [jnp.pad(wq, pad), jnp.pad(wk, pad), jnp.pad(wv, pad)], axis=1)

    kernel = functools.partial(
        _attention_layer_kernel, n_rows=n, size_out=size_out, out_p=out_p)

    out_padded = pl.pallas_call(
        kernel,
        out_shape=jax.ShapeDtypeStruct((n, out_p), x.dtype),
        grid_spec=pltpu.PrefetchScalarGridSpec(
            num_scalar_prefetch=0,
            grid=(1,),
            in_specs=[
                pl.BlockSpec((n, size_in), lambda i: (0, 0)),
                pl.BlockSpec((size_in, 3 * out_p), lambda i: (0, 0)),
            ],
            out_specs=pl.BlockSpec((n, out_p), lambda i: (0, 0)),
        ),
        compiler_params=pltpu.CompilerParams(
            dimension_semantics=("arbitrary",)),
    )(x, w_fused)

    return out_padded[:, :size_out]


def _reference(x, wq, wk, wv):
    q = jax.nn.sigmoid(x @ wq)
    k = jax.nn.sigmoid(x @ wk)
    v = jax.nn.sigmoid(x @ wv)
    scores = (q @ k.T) / k.shape[0]
    p = jax.nn.softmax(scores, axis=1)
    return p @ v


if __name__ == "__main__":
    # Small shapes consistent with the module: x is [N, size_in].
    N, SIZE_IN, SIZE_OUT = 8, 32, 32

    key = jax.random.PRNGKey(0)
    kx, kq, kk, kv = jax.random.split(key, 4)

    x = jax.random.normal(kx, (N, SIZE_IN), dtype=jnp.float32)
    # Deterministic "Linear" weights stored as [size_in, size_out]
    # (i.e. torch weight [size_out, size_in] transposed).
    scale = 1.0 / jnp.sqrt(jnp.float32(SIZE_IN))
    wq = jax.random.uniform(kq, (SIZE_IN, SIZE_OUT), jnp.float32, -scale, scale)
    wk = jax.random.uniform(kk, (SIZE_IN, SIZE_OUT), jnp.float32, -scale, scale)
    wv = jax.random.uniform(kv, (SIZE_IN, SIZE_OUT), jnp.float32, -scale, scale)

    out = attention_layer(x, wq, wk, wv)
    out = jax.block_until_ready(out)

    ref = _reference(x, wq, wk, wv)
    assert out.shape == (N, SIZE_OUT)
    # Tolerance loosened vs 1e-5 because the softmax denominator uses the
    # EUP approximate reciprocal (pl.reciprocal(approx=True)).
    assert jnp.allclose(out, ref, atol=1e-3, rtol=1e-3), "mismatch vs reference"

    print("KERNEL_OK")
</pallas_src>

<mosaic_0001>
module attributes {stable_mosaic.version = 11 : i64} {
  func.func @_attention_layer_kernel(%arg0: i32, %arg1: memref<8x32xf32, #tpu.memory_space<vmem>>, %arg2: memref<32x384xf32, #tpu.memory_space<vmem>>, %arg3: memref<8x128xf32, #tpu.memory_space<vmem>>) attributes {dimension_semantics = [#tpu.dimension_semantics<arbitrary>], iteration_bounds = array<i64: 1>, scalar_prefetch = 0 : i64, scratch_operands = 0 : i64, tpu.core_type = #tpu.core_type<tc>, window_params = [{pipeline_mode = #tpu.pipeline_mode<synchronous>, transform_indices = @transform_0, window_bounds = array<i64: 8, 32>}, {pipeline_mode = #tpu.pipeline_mode<synchronous>, transform_indices = @transform_1, window_bounds = array<i64: 32, 384>}, {pipeline_mode = #tpu.pipeline_mode<synchronous>, transform_indices = @transform_2, window_bounds = array<i64: 8, 128>}]} {
    %c0 = arith.constant 0 : index
    %c0_0 = arith.constant 0 : index
    %0 = vector.load %arg1[%c0, %c0_0] : memref<8x32xf32, #tpu.memory_space<vmem>>, vector<8x32xf32>
    %c0_1 = arith.constant 0 : index
    %c0_2 = arith.constant 0 : index
    %1 = vector.load %arg2[%c0_1, %c0_2] : memref<32x384xf32, #tpu.memory_space<vmem>>, vector<32x384xf32>
    %cst = arith.constant dense<0.000000e+00> : vector<8x384xf32>
    %2 = tpu.matmul %0, %1, %cst {dimension_numbers = #tpu.dot_dimension_numbers<[1], [0], [0], [1], [0, 0, 1, 1], [], []>} : vector<8x32xf32>, vector<32x384xf32>, vector<8x384xf32> -> vector<8x384xf32>
    %3 = arith.negf %2 : vector<8x384xf32>
    %4 = math.exp %3 : vector<8x384xf32>
    %cst_3 = arith.constant 1.000000e+00 : f32
    %5 = vector.broadcast %cst_3 : f32 to vector<8x384xf32>
    %6 = arith.addf %5, %4 : vector<8x384xf32>
    %7 = arith.divf %5, %6 : vector<8x384xf32>
    %8 = vector.extract_strided_slice %7 {offsets = [0, 0], sizes = [8, 128], strides = [1, 1]} : vector<8x384xf32> to vector<8x128xf32>
    %9 = vector.extract_strided_slice %7 {offsets = [0, 128], sizes = [8, 128], strides = [1, 1]} : vector<8x384xf32> to vector<8x128xf32>
    %10 = vector.extract_strided_slice %7 {offsets = [0, 256], sizes = [8, 128], strides = [1, 1]} : vector<8x384xf32> to vector<8x128xf32>
    %11 = tpu.iota {dimensions = array<i32: 1>} : vector<1x128xi32>
    %c32_i32 = arith.constant 32 : i32
    %12 = vector.broadcast %c32_i32 : i32 to vector<1x128xi32>
    %13 = arith.cmpi slt, %11, %12 : vector<1x128xi32>
    %cst_4 = arith.constant 1.250000e-01 : f32
    %cst_5 = arith.constant 0.000000e+00 : f32
    %14 = vector.broadcast %cst_4 : f32 to vector<1x128xf32>
    %15 = vector.broadcast %cst_5 : f32 to vector<1x128xf32>
    %16 = arith.select %13, %14, %15 : vector<1x128xi1>, vector<1x128xf32>
    %17 = vector.broadcast %16 : vector<1x128xf32> to vector<8x128xf32>
    %18 = arith.mulf %8, %17 : vector<8x128xf32>
    %cst_6 = arith.constant dense<0.000000e+00> : vector<8x8xf32>
    %19 = tpu.matmul %18, %9, %cst_6 {dimension_numbers = #tpu.dot_dimension_numbers<[1], [1], [0], [0], [0, 0, 1, 0], [], []>} : vector<8x128xf32>, vector<8x128xf32>, vector<8x8xf32> -> vector<8x8xf32>
    %cst_7 = arith.constant dense<0xFF800000> : vector<8xf32>
    %20 = vector.multi_reduction <maximumf>, %19, %cst_7 [1] : vector<8x8xf32> to vector<8xf32>
    %21 = vector.shape_cast %20 : vector<8xf32> to vector<8x1xf32>
    %22 = vector.broadcast %21 : vector<8x1xf32> to vector<8x8xf32>
    %23 = arith.subf %19, %22 : vector<8x8xf32>
    %24 = math.exp %23 : vector<8x8xf32>
    %cst_8 = arith.constant dense<0.000000e+00> : vector<8xf32>
    %25 = vector.multi_reduction <add>, %24, %cst_8 [1] : vector<8x8xf32> to vector<8xf32>
    %26 = vector.shape_cast %25 : vector<8xf32> to vector<8x1xf32>
    %27 = tpu.reciprocal %26 {approx = true} : vector<8x1xf32> -> vector<8x1xf32>
    %28 = vector.broadcast %27 : vector<8x1xf32> to vector<8x8xf32>
    %29 = arith.mulf %24, %28 : vector<8x8xf32>
    %cst_9 = arith.constant dense<0.000000e+00> : vector<8x128xf32>
    %30 = tpu.matmul %29, %10, %cst_9 {dimension_numbers = #tpu.dot_dimension_numbers<[1], [0], [0], [1], [0, 0, 1, 1], [], []>} : vector<8x8xf32>, vector<8x128xf32>, vector<8x128xf32> -> vector<8x128xf32>
    %c0_10 = arith.constant 0 : index
    %c0_11 = arith.constant 0 : index
    %31 = vector.load %arg3[%c0_10, %c0_11] : memref<8x128xf32, #tpu.memory_space<vmem>>, vector<8x128xf32>
    tpu.vector_store %arg3[%c0_10, %c0_11], %30 {strides = array<i32>} : memref<8x128xf32, #tpu.memory_space<vmem>>, vector<8x128xf32>,
    return
  }
  func.func @transform_0(%arg0: i32) -> (i32, i32) {
    %c0_i32 = arith.constant 0 : i32
    %c0_i32_0 = arith.constant 0 : i32
    %c0_i32_1 = arith.constant 0 : i32
    return %c0_i32, %c0_i32_0 : i32, i32
  }
  func.func @transform_1(%arg0: i32) -> (i32, i32) {
    %c0_i32 = arith.constant 0 : i32
    %c0_i32_0 = arith.constant 0 : i32
    %c0_i32_1 = arith.constant 0 : i32
    return %c0_i32, %c0_i32_0 : i32, i32
  }
  func.func @transform_2(%arg0: i32) -> (i32, i32) {
    %c0_i32 = arith.constant 0 : i32
    %c0_i32_0 = arith.constant 0 : i32
    %c0_i32_1 = arith.constant 0 : i32
    return %c0_i32, %c0_i32_0 : i32, i32
  }
}

</mosaic_0001>

<llo_original>
// kernel: attention_layer.1
$region0: #{attention_layer.1}
  #allocation0 [shape = 'u32[]', space=smem, size = 0x4, offset = 0x4, fixed_abs, tag = 'smem constant byte address 0x4 - core index']
  #allocation1 [shape = 'u32[72,128]{1,0:T(1,128)}', space=vmem, size = 0x9000, scoped, tag = 'internal scratch']
  %s0 = inlined_call_operand.vmem [shape: f32[8,32], index: 0, kind: input, shape index: {}]
  %s1 = inlined_call_operand.vmem [shape: f32[32,384], index: 1, kind: input, shape index: {}]
  %s2 = inlined_call_operand.hbm [shape: f32[8,128], index: 2, kind: output, shape index: {}]
  %s3 = sld [smem:[#allocation0]]
  $region18: #{attention_layer.1} parent=0
    _
  %s5 = ssub.s32 1, %s3
  %s6 = scalar_select 0, %s5, %s3
  $region1: #{attention_layer.1} parent=0
    #allocation2 [shape = 'u8[4096]{0}', space=vmem, size = 0x1000, scoped, tag = 'output window, operand 0, single buffered']
    #allocation3 [shape = 's32[1]{0}', space=sflag, size = 0x4, scoped, tag = 'scoped memory for attention_layer.1']
    %7 = vsyncpa [#allocation3], 0
    // Predicated region
    $region2: #{attention_layer.1} parent=1 // pred_check
      _
    $region3: #{attention_layer.1} parent=1 // pred_check_branch
      %9 = sbr.rel (0) target = $region5
    $region4: #{attention_layer.1} parent=1 // pred_region
      _
    $region5: #{attention_layer.1} parent=1 // pred_fallthru
      _
    // Predicated region
    $region6: #{attention_layer.1} parent=1 // pred_check
      _
    $region7: #{attention_layer.1} parent=1 // pred_check_branch
      %11 = sbr.rel (0) target = $region9
    $region8: #{attention_layer.1} parent=1 // pred_region
      _
    $region9: #{attention_layer.1} parent=1 // pred_fallthru
      _
    %v12 = vld [vmem:[%s0] sm:$0xff]
    %v13 = vld [vmem:[%s1] sm:$0xff]
    %v14 = vld [vmem:[%s1 + $0x8] sm:$0xff]
    %v15 = vld [vmem:[%s1 + $0x10] sm:$0xff]
    %v16 = vld [vmem:[%s1 + $0x18] sm:$0xff]
    %v17 = vld [vmem:[%s1 + $0x20] sm:$0xff]
    %v18 = vld [vmem:[%s1 + $0x28] sm:$0xff]
    %v19 = vld [vmem:[%s1 + $0x30] sm:$0xff]
    %v20 = vld [vmem:[%s1 + $0x38] sm:$0xff]
    %v21 = vld [vmem:[%s1 + $0x40] sm:$0xff]
    %v22 = vld [vmem:[%s1 + $0x48] sm:$0xff]
    %v23 = vld [vmem:[%s1 + $0x50] sm:$0xff]
    %v24 = vld [vmem:[%s1 + $0x58] sm:$0xff]
    %vm25 = vcmask 261120
    %v27 = vsel %vm25, %v12, 0
    %29 = vmatpush.msra.mxu0 0.0
    %30 = vmatpush.msra.mxu0 0.0
    %31 = vmatpush.msra.mxu0 0.0
    %32 = vmatpush.msra.mxu0 0.0
    %33 = vmatpush.msra.mxu0 0.0
    %34 = vmatpush.msra.mxu0 0.0
    %35 = vmatpush.msra.mxu0 0.0
    %36 = vmatpush.msra.mxu0 0.0
    %37 = vmatpush.msra.mxu0 0.0
    %38 = vmatpush.msra.mxu0 0.0
    %39 = vmatpush.msra.mxu0 0.0
    %40 = vmatpush.msra.mxu0 0.0
    %41 = vmatpush.msra.mxu0 %v22
    %42 = vmatpush.msra.mxu0 %v19
    %43 = vmatpush.msra.mxu0 %v16
    %44 = vmatpush.msra.mxu0 %v13
    %45 = vmatmul.f32.gmra.mxu0 %v27
    %v46 = vpop.f32.mrf.mxu0
    %v47 = vadd.f32 0.0, %v46
    %48 = vdwg.mxu0
    %49 = vmatpush.msra.mxu0 0.0
    %50 = vmatpush.msra.mxu0 0.0
    %51 = vmatpush.msra.mxu0 0.0
    %52 = vmatpush.msra.mxu0 0.0
    %53 = vmatpush.msra.mxu0 0.0
    %54 = vmatpush.msra.mxu0 0.0
    %55 = vmatpush.msra.mxu0 0.0
    %56 = vmatpush.msra.mxu0 0.0
    %57 = vmatpush.msra.mxu0 0.0
    %58 = vmatpush.msra.mxu0 0.0
    %59 = vmatpush.msra.mxu0 0.0
    %60 = vmatpush.msra.mxu0 0.0
    %61 = vmatpush.msra.mxu0 %v23
    %62 = vmatpush.msra.mxu0 %v20
    %63 = vmatpush.msra.mxu0 %v17
    %64 = vmatpush.msra.mxu0 %v14
    %65 = vmatmul.f32.gmra.mxu0 %v27
    %v66 = vpop.f32.mrf.mxu0
    %v67 = vadd.f32 0.0, %v66
    %68 = vdwg.mxu0
    %69 = vmatpush.msra.mxu0 0.0
    %70 = vmatpush.msra.mxu0 0.0
    %71 = vmatpush.msra.mxu0 0.0
    %72 = vmatpush.msra.mxu0 0.0
    %73 = vmatpush.msra.mxu0 0.0
    %74 = vmatpush.msra.mxu0 0.0
    %75 = vmatpush.msra.mxu0 0.0
    %76 = vmatpush.msra.mxu0 0.0
    %77 = vmatpush.msra.mxu0 0.0
    %78 = vmatpush.msra.mxu0 0.0
    %79 = vmatpush.msra.mxu0 0.0
    %80 = vmatpush.msra.mxu0 0.0
    %81 = vmatpush.msra.mxu0 %v24
    %82 = vmatpush.msra.mxu0 %v21
    %83 = vmatpush.msra.mxu0 %v18
    %84 = vmatpush.msra.mxu0 %v15
    %85 = vmatmul.f32.gmra.mxu0 %v27
    %v86 = vpop.f32.mrf.mxu0
    %v87 = vadd.f32 0.0, %v86
    %88 = vdwg.mxu0
    %v89 = vxor.u32 %v47, 2147483648
    %v90 = vxor.u32 %v67, 2147483648
    %v91 = vxor.u32 %v87, 2147483648
    %v92 = vmul.f32 %v89, 1.442695
    %v93 = vpow.pop %v92
    %v94 = vmul.f32 %v90, 1.442695
    %v95 = vpow.pop %v94
    %v96 = vmul.f32 %v91, 1.442695
    %v97 = vpow.pop %v96
    %v98 = vadd.f32 %v93, 1.0
    %v99 = vadd.f32 %v95, 1.0
    %v100 = vadd.f32 %v97, 1.0
    %v101 = vrcp.pop %v98
    %v102 = vmul.f32 %v98, %v101
    %v103 = vsub.f32 1.0, %v102
    %v104 = vmul.f32 %v101, %v103
    %v105 = vadd.f32 %v101, %v104
    %vm106 = vweird.f32 %v98
    %vm107 = vweird.f32 %v101
    %vm108 = vmor %vm106, %vm107
    %v109 = vsel %vm108, %v101, %v105
    %v110 = vand.u32 2147483647, %v98
    %vm111 = vcmp.eq.f32.partialorder %v110, 8.507059e+37
    %v112 = vand.u32 %v98, 2147483648
    %v113 = vor.u32 1.1754944e-38, %v112
    %v114 = vsel %vm111, %v113, %v109
    %v115 = vmul.f32 1.0, %v114
    %v116 = vrcp.pop %v99
    %v117 = vmul.f32 %v99, %v116
    %v118 = vsub.f32 1.0, %v117
    %v119 = vmul.f32 %v116, %v118
    %v120 = vadd.f32 %v116, %v119
    %vm121 = vweird.f32 %v99
    %vm122 = vweird.f32 %v116
    %vm123 = vmor %vm121, %vm122
    %v124 = vsel %vm123, %v116, %v120
    %v125 = vand.u32 2147483647, %v99
    %vm126 = vcmp.eq.f32.partialorder %v125, 8.507059e+37
    %v127 = vand.u32 %v99, 2147483648
    %v128 = vor.u32 1.1754944e-38, %v127
    %v129 = vsel %vm126, %v128, %v124
    %v130 = vmul.f32 1.0, %v129
    %v131 = vrcp.pop %v100
    %v132 = vmul.f32 %v100, %v131
    %v133 = vsub.f32 1.0, %v132
    %v134 = vmul.f32 %v131, %v133
    %v135 = vadd.f32 %v131, %v134
    %vm136 = vweird.f32 %v100
    %vm137 = vweird.f32 %v131
    %vm138 = vmor %vm136, %vm137
    %v139 = vsel %vm138, %v131, %v135
    %v140 = vand.u32 2147483647, %v100
    %vm141 = vcmp.eq.f32.partialorder %v140, 8.507059e+37
    %v142 = vand.u32 %v100, 2147483648
    %v143 = vor.u32 1.1754944e-38, %v142
    %v144 = vsel %vm141, %v143, %v139
    %v145 = vmul.f32 1.0, %v144
    %v146 = vlaneseq
    %v147 = vand.u32 %v146, 127
    %vm148 = vcmp.lt.s32.totalorder %v147, 32
    %v149 = vsel %vm148, 0.125, 0.0
    %v150 = vmul.f32 %v115, %v149
    %151 = vmatpush.xpose.msra.mxu0 0.0
    %152 = vmatpush.xpose.msra.mxu0 0.0
    %153 = vmatpush.xpose.msra.mxu0 0.0
    %154 = vmatpush.xpose.msra.mxu0 0.0
    %155 = vmatpush.xpose.msra.mxu0 0.0
    %156 = vmatpush.xpose.msra.mxu0 0.0
    %157 = vmatpush.xpose.msra.mxu0 0.0
    %158 = vmatpush.xpose.msra.mxu0 0.0
    %159 = vmatpush.xpose.msra.mxu0 0.0
    %160 = vmatpush.xpose.msra.mxu0 0.0
    %161 = vmatpush.xpose.msra.mxu0 0.0
    %162 = vmatpush.xpose.msra.mxu0 0.0
    %163 = vmatpush.xpose.msra.mxu0 0.0
    %164 = vmatpush.xpose.msra.mxu0 0.0
    %165 = vmatpush.xpose.msra.mxu0 0.0
    %166 = vmatpush.xpose.msra.mxu0 %v130
    %167 = vmatmul.f32.gmra.mxu0 %v150
    %v168 = vpop.f32.mrf.mxu0
    %v169 = vadd.f32 0.0, %v168
    %170 = vdwg.mxu0
    %vm171 = vcmask 64512
    %v172 = vsel %vm171, %v169, -inf
    %173 = vmax.xlane.f32.xlu0 %v172
    %v174 = vpop.xlane.xlu0 %173
    %v175 = vsub.f32 %v169, %v174
    %v176 = vmul.f32 %v175, 1.442695
    %v177 = vpow.pop %v176
    %v178 = vsel %vm171, %v177, 0.0
    %179 = vadd.xlane.f32.xlu0 %v178
    %v180 = vpop.xlane.xlu0 %179
    %v181 = vrcp.pop %v180
    %v182 = vmul.f32 %v177, %v181
    %v184 = vsel %vm171, %v182, 0
    %186 = vmatpush.msra.mxu0 0.0
    %187 = vmatpush.msra.mxu0 0.0
    %188 = vmatpush.msra.mxu0 0.0
    %189 = vmatpush.msra.mxu0 0.0
    %190 = vmatpush.msra.mxu0 0.0
    %191 = vmatpush.msra.mxu0 0.0
    %192 = vmatpush.msra.mxu0 0.0
    %193 = vmatpush.msra.mxu0 0.0
    %194 = vmatpush.msra.mxu0 0.0
    %195 = vmatpush.msra.mxu0 0.0
    %196 = vmatpush.msra.mxu0 0.0
    %197 = vmatpush.msra.mxu0 0.0
    %198 = vmatpush.msra.mxu0 0.0
    %199 = vmatpush.msra.mxu0 0.0
    %200 = vmatpush.msra.mxu0 0.0
    %201 = vmatpush.msra.mxu0 %v145
    %202 = vmatmul.f32.gmra.mxu0 %v184
    %v203 = vpop.f32.mrf.mxu0
    %v204 = vadd.f32 0.0, %v203
    %205 = vdwg.mxu0
    %206 = vst [vmem:[#allocation2] sm:$0xff] %v204
    // Predicated region
    $region10: #{attention_layer.1} parent=1 // pred_check
      _
    $region11: #{attention_layer.1} parent=1 // pred_check_branch
      %208 = sbr.rel (0) target = $region13
    $region12: #{attention_layer.1} parent=1 // pred_region
      %210 = vsyncadd [#allocation3], 0
      %s212 = sshll.u32 [#allocation2], 4
      %s213 = int_to_ptr.vmem [resolvable:$true] %s212
      %s214 = sshll.u32 %s2, 4
      %s215 = int_to_ptr.hbm [resolvable:$true] %s214
      %217 = dma.vmem_to_hbm [thread:$0]  %s213, 128, %s215, [#allocation3]
    $region13: #{attention_layer.1} parent=1 // pred_fallthru
      _
    // Predicated region
    $region14: #{attention_layer.1} parent=1 // pred_check
      _
    $region15: #{attention_layer.1} parent=1 // pred_check_branch
      %219 = sbr.rel (0) target = $region17
    $region16: #{attention_layer.1} parent=1 // pred_region
      %221 = dma.done [#allocation3], 128
    $region17: #{attention_layer.1} parent=1 // pred_fallthru
      _
    %222 = vsyncpa [#allocation3], 1

</llo_original>
